<compile_context>
chip_gen: v7x
topology: tpu7x:2x2x1
jax: 0.10.0
libtpu: 0.0.40
codegen_flags: <defaults>
</compile_context>

<pallas_src>
import jax
import jax.numpy as jnp
from jax.experimental import pallas as pl
from jax.experimental.pallas import tpu as pltpu


_TARGET_BLOCK_BYTES = 1 << 20  # ~1 MiB per (B, tile_f) block


def _mixup_batch_kernel(lam_ref, x_ref, o_ref):
    """o = x_rolled + lam * (x - x_rolled), roll by 1 along the batch axis."""
    lam = lam_ref[0]                       # f32 scalar from SMEM
    x = x_ref[...]                         # (B, tile_f) block, B kept whole
    B = x.shape[0]

    if B == 1:
        x_rolled = x
    else:
        # Block-local roll by 1 along the batch (sublane) axis. slice+concat
        # is correct for any B and any packed dtype; the kernel is HBM-bound,
        # so this VMEM-local shuffle does not affect wall clock.
        x_rolled = jnp.concatenate([x[B - 1:B, :], x[:B - 1, :]], axis=0)

    xf = x.astype(jnp.float32)
    rf = x_rolled.astype(jnp.float32)
    o_ref[...] = (rf + lam * (xf - rf)).astype(o_ref.dtype)


def _pick_tile_f(B, F_padded, itemsize):
    """Byte-targeted, lane-dense (multiple of 128) tile along the feature axis."""
    t = (_TARGET_BLOCK_BYTES // (B * itemsize)) // 128 * 128
    t = max(128, min(t, F_padded))
    # Keep at least 2 grid steps when possible: software pipelining + v7x
    # megacore sharding of the feature axis (no-op on single-TC v5e/v6e).
    if F_padded >= 256:
        half = max(128, (F_padded // 2) // 128 * 128)
        t = min(t, half)
    return t


def random_mixup(batch, target, *, num_classes, p=0.5, alpha=1.0, key):
    """JAX/Pallas equivalent of RandomMixup.forward.

    batch:  (B, C, H, W) float
    target: (B,) integer class ids
    returns (mixed_batch (B,C,H,W), mixed_target_onehot (B, num_classes))
    """
    assert batch.ndim == 4, "Batch ndim should be 4"
    assert target.ndim == 1, "Target ndim should be 1"
    B, C, H, W = batch.shape
    F = C * H * W
    F_padded = ((F + 127) // 128) * 128

    # Randomness (glue, outside kernel): apply-gate and Beta(alpha, alpha) draw.
    k_apply, k_lam = jax.random.split(key)
    apply_mix = jax.random.uniform(k_apply) < p
    lam = jax.random.beta(k_lam, alpha, alpha).astype(jnp.float32)

    onehot = jax.nn.one_hot(target, num_classes, dtype=batch.dtype)

    itemsize = jnp.dtype(batch.dtype).itemsize
    tile_f = _pick_tile_f(B, F_padded, itemsize)
    grid = (pl.cdiv(F_padded, tile_f),)

    smem_scalar = pl.BlockSpec(memory_space=pltpu.MemorySpace.SMEM)
    feat_block = pl.BlockSpec((B, tile_f), lambda j: (0, j))

    mix_call = pl.pallas_call(
        _mixup_batch_kernel,
        out_shape=jax.ShapeDtypeStruct((B, F_padded), batch.dtype),
        grid=grid,
        in_specs=[smem_scalar, feat_block],
        out_specs=feat_block,
        compiler_params=pltpu.CompilerParams(
            dimension_semantics=("parallel",)),
    )

    def _apply(batch, onehot, lam):
        x2d = batch.reshape(B, F)
        if F_padded != F:
            x2d = jnp.pad(x2d, ((0, 0), (0, F_padded - F)))
        mixed_x = mix_call(lam.reshape(1), x2d)
        if F_padded != F:
            mixed_x = mixed_x[:, :F]
        # Target mix: (B, num_classes) is tiny -> plain JAX (XLA fuses it).
        oh_rolled = jnp.roll(onehot, 1, axis=0)
        mixed_t = (oh_rolled + lam * (onehot - oh_rolled)).astype(batch.dtype)
        return mixed_x.reshape(B, C, H, W), mixed_t

    def _skip(batch, onehot, lam):
        # "return unchanged" branch: no pad/slice, no HBM pass over the batch.
        return batch, onehot

    return jax.lax.cond(apply_mix, _apply, _skip, batch, onehot, lam)


if __name__ == "__main__":
    key = jax.random.PRNGKey(0)
    k_batch, k_tgt, k_mix = jax.random.split(key, 3)

    B, C, H, W = 2, 4, 16, 16
    NUM_CLASSES = 10

    batch = jax.random.normal(k_batch, (B, C, H, W), dtype=jnp.float32)
    target = jax.random.randint(k_tgt, (B,), 0, NUM_CLASSES, dtype=jnp.int32)

    @jax.jit
    def run(batch, target, key):
        return random_mixup(batch, target, num_classes=NUM_CLASSES,
                            p=0.5, alpha=1.0, key=key)

    mixed_batch, mixed_target = run(batch, target, k_mix)
    jax.block_until_ready((mixed_batch, mixed_target))

    # Reference check in plain JAX (same lambda / gate values).
    k_apply, k_lam = jax.random.split(k_mix)
    apply_mix = jax.random.uniform(k_apply) < 0.5
    lam = jax.random.beta(k_lam, 1.0, 1.0).astype(jnp.float32)
    lam_eff = jnp.where(apply_mix, lam, 1.0)
    oh = jax.nn.one_hot(target, NUM_CLASSES, dtype=jnp.float32)
    ref_batch = lam_eff * batch + (1.0 - lam_eff) * jnp.roll(batch, 1, axis=0)
    ref_target = lam_eff * oh + (1.0 - lam_eff) * jnp.roll(oh, 1, axis=0)
    assert jnp.allclose(mixed_batch, ref_batch, atol=1e-5, rtol=1e-5)
    assert jnp.allclose(mixed_target, ref_target, atol=1e-5, rtol=1e-5)

    print("KERNEL_OK")
</pallas_src>

<mosaic_0001>
module attributes {stable_mosaic.version = 11 : i64} {
  func.func @_mixup_batch_kernel(%arg0: i32, %arg1: memref<1xf32, #tpu.memory_space<smem>>, %arg2: memref<2x512xf32, #tpu.memory_space<vmem>>, %arg3: memref<2x512xf32, #tpu.memory_space<vmem>>) attributes {dimension_semantics = [#tpu.dimension_semantics<parallel>], iteration_bounds = array<i64: 2>, scalar_prefetch = 0 : i64, scratch_operands = 0 : i64, tpu.core_type = #tpu.core_type<tc>, window_params = [{transform_indices = @transform_0, window_bounds = array<i64: 1>}, {transform_indices = @transform_1, window_bounds = array<i64: 2, 512>}, {transform_indices = @transform_2, window_bounds = array<i64: 2, 512>}]} {
    %c0 = arith.constant 0 : index
    %0 = memref.load %arg1[%c0] : memref<1xf32, #tpu.memory_space<smem>>
    %c0_0 = arith.constant 0 : index
    %c0_1 = arith.constant 0 : index
    %1 = vector.load %arg2[%c0_0, %c0_1] : memref<2x512xf32, #tpu.memory_space<vmem>>, vector<2x512xf32>
    %2 = vector.extract_strided_slice %1 {offsets = [1, 0], sizes = [1, 512], strides = [1, 1]} : vector<2x512xf32> to vector<1x512xf32>
    %3 = vector.extract_strided_slice %1 {offsets = [0, 0], sizes = [1, 512], strides = [1, 1]} : vector<2x512xf32> to vector<1x512xf32>
    %4 = tpu.concatenate %2, %3 in 0 : vector<1x512xf32>, vector<1x512xf32> -> vector<2x512xf32>
    %5 = arith.subf %1, %4 : vector<2x512xf32>
    %6 = vector.broadcast %0 : f32 to vector<2x512xf32>
    %7 = arith.mulf %6, %5 : vector<2x512xf32>
    %8 = arith.addf %4, %7 : vector<2x512xf32>
    %c0_2 = arith.constant 0 : index
    %c0_3 = arith.constant 0 : index
    %9 = vector.load %arg3[%c0_2, %c0_3] : memref<2x512xf32, #tpu.memory_space<vmem>>, vector<2x512xf32>
    tpu.vector_store %arg3[%c0_2, %c0_3], %8 {strides = array<i32>} : memref<2x512xf32, #tpu.memory_space<vmem>>, vector<2x512xf32>,
    return
  }
  func.func @transform_0(%arg0: i32) -> i32 {
    %c0_i32 = arith.constant 0 : i32
    %c0_i32_0 = arith.constant 0 : i32
    return %c0_i32 : i32
  }
  func.func @transform_1(%arg0: i32) -> (i32, i32) {
    %c0_i32 = arith.constant 0 : i32
    %c0_i32_0 = arith.constant 0 : i32
    return %c0_i32, %arg0 : i32, i32
  }
  func.func @transform_2(%arg0: i32) -> (i32, i32) {
    %c0_i32 = arith.constant 0 : i32
    %c0_i32_0 = arith.constant 0 : i32
    return %c0_i32, %arg0 : i32, i32
  }
}

</mosaic_0001>

<llo_original>
// kernel: branch_1_fun.1
$region0: #{branch_1_fun.1}
  #allocation0 [shape = 'u32[]', space=smem, size = 0x4, offset = 0x4, fixed_abs, tag = 'smem constant byte address 0x4 - core index']
  #allocation1 [shape = 'u32[144,128]{1,0:T(1,128)}', space=vmem, size = 0x12000, scoped, tag = 'internal scratch']
  #allocation2 [shape = 'f32[1]{0:T(128)S(6)}', space=smem, size = 0x200, scoped, tag = 'scoped memory for branch_1_fun.1']
  %s0 = inlined_call_operand.<no memory space> [shape: f32[1], index: 0, kind: input, shape index: {}]
  %s1 = inlined_call_operand.vmem [shape: f32[2,1024], index: 1, kind: input, shape index: {}]
  %s2 = inlined_call_operand.vmem [shape: f32[2,1024], index: 2, kind: output, shape index: {}]
  %s3 = sld [smem:[#allocation0]]
  $region41: #{branch_1_fun.1} parent=0
    _
  %s5 = ssub.s32 1, %s3
  %s6 = scalar_select 0, %s5, %s3
  %7 = sst [smem:[#allocation2]] %s0
  loop: start=0, step=1, limit=4
  $region2: #{branch_1_fun.1} parent=0 // loop_pre_header
    _
  $region3: #{branch_1_fun.1} parent=0 // loop_header
    %s9 = sphi 0, %s13
    %p10 = scmp.ge.s32.totalorder %s9, 4
    %s17 = sphi 0, %s17
    %s19 = sphi 0, %s17
    %s20 = sphi 0, %s19
    %s34 = sphi 0, %s20
    %s40 = sphi 0, %s42
    %s43 = sphi 0, %s40
    %s44 = sphi 0, %s43
    %s60 = sphi 0, %s44
    %s66 = sphi 0, %s68
    %s69 = sphi 0, %s66
    %s70 = sphi 0, %s69
    %s86 = sphi 0, %s70
  $region4: #{branch_1_fun.1} parent=0 // loop_header_branch
    %12 = sbr.rel (%p10) target = $region8
  $region5: #{branch_1_fun.1} parent=0 // loop_body
    %s14 = ssub.s32 %s9, 1
    %s15 = ssub.s32 %s9, 2
    %s16 = sadd.s32 %s9, 1
    %s18 = sadd.s32 %s17, 1
    %p21 = scmp.eq.s32.totalorder %s9, 1
    %p22 = scmp.ne.s32.totalorder %s17, %s19
    %p23 = scmp.eq.s32.totalorder %s9, 0
    %p24 = por %p22, %p23
    %p25 = scmp.ne.s32.totalorder %s17, %s19
    %p26 = scmp.eq.s32.totalorder %s14, 1
    %p27 = por %p25, %p26
    %p28 = scmp.ne.s32.totalorder %s19, %s20
    %p29 = scmp.eq.s32.totalorder %s14, 0
    %p30 = por %p28, %p29
    %p31 = scmp.ne.s32.totalorder %s19, %s20
    %p32 = scmp.eq.s32.totalorder %s15, 1
    %p33 = por %p31, %p32
    %p35 = scmp.ne.s32.totalorder %s20, %s34
    %p36 = scmp.eq.s32.totalorder %s15, 0
    %p37 = por %p35, %p36
    %s38 = ssub.s32 %s9, %s16
    %p39 = scmp.eq.s32.totalorder %s38, 0
    %s41 = sadd.s32 %s40, 1
    %s42 = scalar_select %p39, %s40, %s41
    %p45 = pneg %p39
    %p46 = scmp.eq.s32.totalorder %s9, 1
    %p47 = por %p45, %p46
    %p48 = scmp.ne.s32.totalorder %s40, %s43
    %p49 = scmp.eq.s32.totalorder %s9, 0
    %p50 = por %p48, %p49
    %p51 = scmp.ne.s32.totalorder %s40, %s43
    %p52 = scmp.eq.s32.totalorder %s14, 1
    %p53 = por %p51, %p52
    %p54 = scmp.ne.s32.totalorder %s43, %s44
    %p55 = scmp.eq.s32.totalorder %s14, 0
    %p56 = por %p54, %p55
    %p57 = scmp.ne.s32.totalorder %s43, %s44
    %p58 = scmp.eq.s32.totalorder %s15, 1
    %p59 = por %p57, %p58
    %p61 = scmp.ne.s32.totalorder %s44, %s60
    %p62 = scmp.eq.s32.totalorder %s15, 0
    %p63 = por %p61, %p62
    %s64 = ssub.s32 %s9, %s16
    %p65 = scmp.eq.s32.totalorder %s64, 0
    %s67 = sadd.s32 %s66, 1
    %s68 = scalar_select %p65, %s66, %s67
    %p71 = pneg %p65
    %p72 = scmp.eq.s32.totalorder %s9, 1
    %p73 = por %p71, %p72
    %p74 = scmp.ne.s32.totalorder %s66, %s69
    %p75 = scmp.eq.s32.totalorder %s9, 0
    %p76 = por %p74, %p75
    %p77 = scmp.ne.s32.totalorder %s66, %s69
    %p78 = scmp.eq.s32.totalorder %s14, 1
    %p79 = por %p77, %p78
    %p80 = scmp.ne.s32.totalorder %s69, %s70
    %p81 = scmp.eq.s32.totalorder %s14, 0
    %p82 = por %p80, %p81
    %p83 = scmp.ne.s32.totalorder %s69, %s70
    %p84 = scmp.eq.s32.totalorder %s15, 1
    %p85 = por %p83, %p84
    %p87 = scmp.ne.s32.totalorder %s70, %s86
    %p88 = scmp.eq.s32.totalorder %s15, 0
    %p89 = por %p87, %p88
    %p90 = scmp.le.s32.totalorder 1, %s9
    %p91 = scmp.lt.s32.totalorder %s9, 3
    %p92 = pnand %p90, %p91
    %p93 = pneg %p92
    // Predicated region
    $region9: #{branch_1_fun.1} parent=5 // pred_check
      _
    $region10: #{branch_1_fun.1} parent=5 // pred_check_branch
      %95 = sbr.rel (%p92) target = $region12
    $region11: #{branch_1_fun.1} parent=5 // pred_region
      %s96 = ssub.s32 %s9, 1
      // Predicated region
      $region13: #{branch_1_fun.1} parent=11 // pred_check
        %p97 = pneg %p30
      $region14: #{branch_1_fun.1} parent=11 // pred_check_branch
        %99 = sbr.rel (%p97) target = $region16
      $region15: #{branch_1_fun.1} parent=11 // pred_region
        _
      $region16: #{branch_1_fun.1} parent=11 // pred_fallthru
        _
    $region12: #{branch_1_fun.1} parent=5 // pred_fallthru
      _
    %p100 = scmp.lt.s32.totalorder %s9, 2
    // Predicated region
    $region17: #{branch_1_fun.1} parent=5 // pred_check
      %p101 = pneg %p100
    $region18: #{branch_1_fun.1} parent=5 // pred_check_branch
      %103 = sbr.rel (%p101) target = $region20
    $region19: #{branch_1_fun.1} parent=5 // pred_region
      // Predicated region
      $region21: #{branch_1_fun.1} parent=19 // pred_check
        %p104 = pneg %p50
      $region22: #{branch_1_fun.1} parent=19 // pred_check_branch
        %106 = sbr.rel (%p104) target = $region24
      $region23: #{branch_1_fun.1} parent=19 // pred_region
        %s107 = smul.u32 4, %s9
        %p108 = scmp.lt.s32.totalorder %s107, 7
        %s109 = scalar_select %p108, %s107, 7
        %s110 = smul.addr %s109, 2
        %s111 = scalar_lea.vmem %s1, %s110
        %s112 = smul.u32 4, %s9
      $region24: #{branch_1_fun.1} parent=19 // pred_fallthru
        _
    $region20: #{branch_1_fun.1} parent=5 // pred_fallthru
      _
    %p113 = scmp.le.s32.totalorder 1, %s9
    %p114 = scmp.lt.s32.totalorder %s9, 3
    %p115 = pnand %p113, %p114
    %p116 = pneg %p115
    // Predicated region
    $region25: #{branch_1_fun.1} parent=5 // pred_check
      _
    $region26: #{branch_1_fun.1} parent=5 // pred_check_branch
      %118 = sbr.rel (%p115) target = $region28
    $region27: #{branch_1_fun.1} parent=5 // pred_region
      %s119 = ssub.s32 %s9, 1
      %p120 = pneg %p30
      %p121 = pneg %p27
      %s122 = smul.u32 4, %s14
      %p123 = scmp.lt.s32.totalorder %s122, 7
      %s124 = scalar_select %p123, %s122, 7
      %s125 = smul.addr %s124, 2
      %s126 = scalar_lea.vmem %s1, %s125
      %p127 = pneg %p56
      %p128 = pneg %p53
      %p129 = pneg %p82
      %p130 = pneg %p79
      %s131 = smul.u32 4, %s14
      %p132 = scmp.lt.s32.totalorder %s131, 7
      %s133 = scalar_select %p132, %s131, 7
      %s134 = smul.addr %s133, 2
      %s135 = scalar_lea.vmem %s2, %s134
      %s136 = smul.u32 4, %s14
      %p137 = scmp.lt.s32.totalorder %s136, 7
      %s138 = scalar_select %p137, %s136, 7
      %s139 = smul.addr %s138, 2
      %s140 = scalar_lea.vmem %s1, %s139
      %s141 = smul.u32 4, %s14
      %s142 = smul.u32 4, %s14
      %p143 = scmp.lt.s32.totalorder %s142, 7
      %s144 = scalar_select %p143, %s142, 7
      %s145 = smul.addr %s144, 2
      %s146 = scalar_lea.vmem %s2, %s145
      %s147 = smul.u32 4, %s14
      %s148 = sld [smem:[#allocation2]]
      %v149 = vld [vmem:[%s140] sm:$0xff]
      %v151 = vlaneseq
      %v152 = vshrl.u32 %v151, 7
      %v153 = vsub.s32 1, %v152
      %v154 = vrot.slane %v149, %v153
      %v155 = vlaneseq
      %v156 = vshrl.u32 %v155, 7
      %v157 = vsub.s32 3, %v156
      %v158 = vrot.slane %v149, %v157
      %v159 = vlaneseq
      %v160 = vshrl.u32 %v159, 7
      %v161 = vsub.s32 5, %v160
      %v162 = vrot.slane %v149, %v161
      %v163 = vlaneseq
      %v164 = vshrl.u32 %v163, 7
      %v165 = vsub.s32 7, %v164
      %v166 = vrot.slane %v149, %v165
      %v171 = vlaneseq
      %v172 = vshrl.u32 %v171, 7
      %v173 = vsub.s32 0, %v172
      %v174 = vrot.slane %v149, %v173
      %v175 = vlaneseq
      %v176 = vshrl.u32 %v175, 7
      %v177 = vsub.s32 2, %v176
      %v178 = vrot.slane %v149, %v177
      %v179 = vlaneseq
      %v180 = vshrl.u32 %v179, 7
      %v181 = vsub.s32 4, %v180
      %v182 = vrot.slane %v149, %v181
      %v183 = vlaneseq
      %v184 = vshrl.u32 %v183, 7
      %v185 = vsub.s32 6, %v184
      %v186 = vrot.slane %v149, %v185
      %vm191 = vcmask 1040384
      %v192 = vsel %vm191, %v154, %v174
      %v193 = vsel %vm191, %v158, %v178
      %v194 = vsel %vm191, %v162, %v182
      %v195 = vsel %vm191, %v166, %v186
      %v200 = vcombine.low %v192, %v193
      %v201 = vcombine.low %v194, %v195
      %v203 = vunpack.c.l.s4 1983009808
      %v204 = vunpack.c.0.s8 %v203
      %v205 = vlaneseq
      %v206 = vshrl.u32 %v205, 7
      %v207 = vsub.s32 %v204, %v206
      %v208 = vrot.slane %v200, %v207
      %v210 = vunpack.c.l.s4 1983009808
      %v211 = vunpack.c.0.s8 %v210
      %v212 = vlaneseq
      %v213 = vshrl.u32 %v212, 7
      %v214 = vsub.s32 %v211, %v213
      %v215 = vrot.slane %v201, %v214
      %v216 = vcombine.low %v208, %v215
      %v218 = vsub.f32 %v149, %v216
      %v219 = vstv %s148
      %v220 = vmul.f32 %v219, %v218
      %v222 = vcombine.high %v220, %v220
      %v224 = vunpack.c.l.s4 1983009808
      %v225 = vunpack.c.0.s8 %v224
      %v226 = vlaneseq
      %v227 = vshrl.u32 %v226, 7
      %v228 = vsub.s32 %v225, %v227
      %v229 = vrot.slane %v220, %v228
      %v231 = vunpack.c.l.s4 1983009808
      %v232 = vunpack.c.0.s8 %v231
      %v233 = vlaneseq
      %v234 = vshrl.u32 %v233, 7
      %v235 = vsub.s32 %v232, %v234
      %v236 = vrot.slane %v222, %v235
      %v237 = vcombine.high %v229, %v229
      %v238 = vcombine.high %v236, %v236
      %v243 = vadd.f32 %v192, %v229
      %v244 = vadd.f32 %v193, %v237
      %v245 = vadd.f32 %v194, %v236
      %v246 = vadd.f32 %v195, %v238
      %v251 = vcombine.low %v243, %v244
      %v252 = vcombine.low %v245, %v246
      %v254 = vunpack.c.l.s4 1983009808
      %v255 = vunpack.c.0.s8 %v254
      %v256 = vlaneseq
      %v257 = vshrl.u32 %v256, 7
      %v258 = vsub.s32 %v255, %v257
      %v259 = vrot.slane %v251, %v258
      %v261 = vunpack.c.l.s4 1983009808
      %v262 = vunpack.c.0.s8 %v261
      %v263 = vlaneseq
      %v264 = vshrl.u32 %v263, 7
      %v265 = vsub.s32 %v262, %v264
      %v266 = vrot.slane %v252, %v265
      %v267 = vcombine.low %v259, %v266
      %269 = vst [vmem:[%s146] sm:$0xff] %v267
      %s270 = smul.u32 4, %s14
      %p271 = scmp.lt.s32.totalorder %s270, 7
      %s272 = scalar_select %p271, %s270, 7
      %s273 = smul.addr %s272, 2
      %s274 = scalar_lea.vmem %s2, %s273
      // Predicated region
      $region29: #{branch_1_fun.1} parent=27 // pred_check
        %p275 = pneg %p79
      $region30: #{branch_1_fun.1} parent=27 // pred_check_branch
        %277 = sbr.rel (%p275) target = $region32
      $region31: #{branch_1_fun.1} parent=27 // pred_region
        %s278 = smul.u32 4, %s14
      $region32: #{branch_1_fun.1} parent=27 // pred_fallthru
        _
    $region28: #{branch_1_fun.1} parent=5 // pred_fallthru
      _
    %p279 = scmp.le.s32.totalorder 2, %s9
    // Predicated region
    $region33: #{branch_1_fun.1} parent=5 // pred_check
      %p280 = pneg %p279
    $region34: #{branch_1_fun.1} parent=5 // pred_check_branch
      %282 = sbr.rel (%p280) target = $region36
    $region35: #{branch_1_fun.1} parent=5 // pred_region
      %s283 = ssub.s32 %s9, 2
      // Predicated region
      $region37: #{branch_1_fun.1} parent=35 // pred_check
        %p284 = pneg %p85
      $region38: #{branch_1_fun.1} parent=35 // pred_check_branch
        %286 = sbr.rel (%p284) target = $region40
      $region39: #{branch_1_fun.1} parent=35 // pred_region
        %s287 = smul.u32 4, %s15
        %p288 = scmp.lt.s32.totalorder %s287, 7
        %s289 = scalar_select %p288, %s287, 7
        %s290 = smul.addr %s289, 2
        %s291 = scalar_lea.vmem %s2, %s290
      $region40: #{branch_1_fun.1} parent=35 // pred_fallthru
        _
    $region36: #{branch_1_fun.1} parent=5 // pred_fallthru
      _
  $region6: #{branch_1_fun.1} parent=0 // loop_footer
    %s13 = sadd.s32 1, %s9
  $region7: #{branch_1_fun.1} parent=0 // loop_footer_branch
    %8 = sbr.rel target = $region3
  $region8: #{branch_1_fun.1} parent=0 // loop_exit
    _

</llo_original>
